<compile_context>
chip_gen: v7x
topology: tpu7x:2x2x1
jax: 0.10.0
libtpu: 0.0.40
codegen_flags: <defaults>
</compile_context>

<pallas_src>
import jax
import jax.numpy as jnp
from jax.experimental import pallas as pl
from jax.experimental.pallas import tpu as pltpu


def _swish_kernel(x_ref, o_ref):
    x = x_ref[...]
    # Compute in f32 (safe on all generations; a bf16 path on v6e/v7x would be
    # possible, but the kernel is HBM-bound so it would not change wall time).
    xf = x.astype(jnp.float32)
    # x * sigmoid(x) = x / (1 + exp(-x)); exp and the approx reciprocal both
    # run on the EUP slot, leaving the VALU with just the add + multiply.
    y = xf * pl.reciprocal(1.0 + jnp.exp(-xf), approx=True)
    o_ref[...] = y.astype(o_ref.dtype)


# ~2 MiB per block buffer. Input + output each double-buffered -> ~8 MiB of
# live VMEM, safely under v5e's 16 MiB default scoped-VMEM limit and well under
# v6e/v7x's 32 MiB.
_TARGET_BLOCK_BYTES = 2 * 1024 * 1024


def swish(x, *, target_block_bytes=_TARGET_BLOCK_BYTES):
    """Elementwise swish via Pallas. Works for any shape / float dtype."""
    orig_shape = x.shape
    orig_dtype = x.dtype
    n = x.size
    itemsize = jnp.dtype(orig_dtype).itemsize

    x_flat = jnp.ravel(x)

    # ---- pick a lane-dense 2-D layout (rows, lanes): lanes is a wide multiple
    # ---- of 128 so stores are long unmasked vst runs; prefer rows % 8 == 0.
    lanes = 0
    for cand in (1024, 512, 256, 128):
        if n % cand == 0 and (n // cand) % 8 == 0:
            lanes = cand
            break
    if lanes == 0:
        for cand in (1024, 512, 256, 128):
            if n % cand == 0:
                lanes = cand
                break

    if lanes == 0:
        # Unaligned length: pad up to a multiple of 8*128. swish(0) == 0 and
        # the tail is sliced off, so this is purely a layout convenience.
        lanes = 128
        n_pad = pl.cdiv(n, 8 * lanes) * (8 * lanes)
        x_flat = jnp.concatenate(
            [x_flat, jnp.zeros((n_pad - n,), dtype=orig_dtype)])
    else:
        n_pad = n

    rows = n_pad // lanes

    # ---- block size: as large as possible up to ~target_block_bytes.
    max_block_rows = max(8, target_block_bytes // (lanes * itemsize))

    if rows <= max_block_rows:
        # Whole (small) array as a single block. block_shape == full array
        # dims, so the (8, 128) divisibility rule does not apply.
        block_rows = rows
        grid_rows = rows
    else:
        block_rows = (max_block_rows // 8) * 8
        grid_rows = pl.cdiv(rows, block_rows) * block_rows
        if grid_rows != rows:
            extra = (grid_rows - rows) * lanes
            x_flat = jnp.concatenate(
                [x_flat, jnp.zeros((extra,), dtype=orig_dtype)])
            n_pad = grid_rows * lanes

    x2d = x_flat.reshape(grid_rows, lanes)
    grid = (grid_rows // block_rows,)

    out2d = pl.pallas_call(
        _swish_kernel,
        out_shape=jax.ShapeDtypeStruct((grid_rows, lanes), orig_dtype),
        grid_spec=pltpu.PrefetchScalarGridSpec(
            num_scalar_prefetch=0,
            grid=grid,
            # Default double-buffering; pl.Buffered(3) only if a profile ever
            # shows exposed DMA at this block size (it shouldn't for a stream).
            in_specs=[pl.BlockSpec((block_rows, lanes), lambda i: (i, 0))],
            out_specs=pl.BlockSpec((block_rows, lanes), lambda i: (i, 0)),
        ),
        compiler_params=pltpu.CompilerParams(
            # Single data-parallel axis -> sharded across v7x's 2 TensorCores
            # whenever the grid has >= 2 steps.
            dimension_semantics=("parallel",)),
    )(x2d)

    out_flat = out2d.reshape(-1)
    if n_pad != n:
        out_flat = out_flat[:n]
    return out_flat.reshape(orig_shape)


if __name__ == "__main__":
    key = jax.random.PRNGKey(0)

    def _check(y, x):
        ref = x * jax.nn.sigmoid(x)
        assert y.shape == x.shape and y.dtype == x.dtype
        # approx=True reciprocal (EUP vrcp) trades a few low bits for speed.
        err = float(jnp.max(jnp.abs(y.astype(jnp.float32) -
                                    ref.astype(jnp.float32))))
        assert jnp.allclose(y, ref, atol=1e-2, rtol=1e-2), err

    # Main case (matches the module's test shape): 2048 elems -> aligned,
    # single (8, 256) block, no padding / slicing.
    x = jax.random.normal(key, (2, 4, 16, 16), dtype=jnp.float32)
    y = swish(x)
    jax.block_until_ready(y)
    _check(y, x)

    # Unaligned size -> exercises the (rare) pad + slice fallback path.
    x_odd = jax.random.normal(jax.random.PRNGKey(1), (1, 3, 17, 19),
                              dtype=jnp.float32)
    y_odd = swish(x_odd)
    jax.block_until_ready(y_odd)
    _check(y_odd, x_odd)

    # Multi-block path (grid > 1) with a shrunken block budget so the test
    # input stays small: (16, 1024) blocks, grid=(16,).
    x_big = jax.random.normal(jax.random.PRNGKey(2), (8, 8, 64, 64),
                              dtype=jnp.float32)
    y_big = swish(x_big, target_block_bytes=64 * 1024)
    jax.block_until_ready(y_big)
    _check(y_big, x_big)

    print("KERNEL_OK")
</pallas_src>

<mosaic_0001>
module attributes {stable_mosaic.version = 11 : i64} {
  func.func @_swish_kernel(%arg0: i32, %arg1: memref<8x256xf32, #tpu.memory_space<vmem>>, %arg2: memref<8x256xf32, #tpu.memory_space<vmem>>) attributes {dimension_semantics = [#tpu.dimension_semantics<parallel>], iteration_bounds = array<i64: 1>, scalar_prefetch = 0 : i64, scratch_operands = 0 : i64, tpu.core_type = #tpu.core_type<tc>, window_params = [{transform_indices = @transform_0, window_bounds = array<i64: 8, 256>}, {transform_indices = @transform_1, window_bounds = array<i64: 8, 256>}]} {
    %c0 = arith.constant 0 : index
    %c0_0 = arith.constant 0 : index
    %0 = vector.load %arg1[%c0, %c0_0] : memref<8x256xf32, #tpu.memory_space<vmem>>, vector<8x256xf32>
    %cst = arith.constant 0.000000e+00 : f32
    %1 = vector.broadcast %cst : f32 to vector<8x256xf32>
    %2 = arith.subf %1, %0 : vector<8x256xf32>
    %3 = math.exp %2 : vector<8x256xf32>
    %cst_1 = arith.constant 1.000000e+00 : f32
    %4 = vector.broadcast %cst_1 : f32 to vector<8x256xf32>
    %5 = arith.addf %4, %3 : vector<8x256xf32>
    %6 = tpu.reciprocal %5 {approx = true} : vector<8x256xf32> -> vector<8x256xf32>
    %7 = arith.mulf %0, %6 : vector<8x256xf32>
    %c0_2 = arith.constant 0 : index
    %c0_3 = arith.constant 0 : index
    %8 = vector.load %arg2[%c0_2, %c0_3] : memref<8x256xf32, #tpu.memory_space<vmem>>, vector<8x256xf32>
    tpu.vector_store %arg2[%c0_2, %c0_3], %7 {strides = array<i32>} : memref<8x256xf32, #tpu.memory_space<vmem>>, vector<8x256xf32>,
    return
  }
  func.func @transform_0(%arg0: i32) -> (i32, i32) {
    %c0_i32 = arith.constant 0 : i32
    %c0_i32_0 = arith.constant 0 : i32
    return %arg0, %c0_i32 : i32, i32
  }
  func.func @transform_1(%arg0: i32) -> (i32, i32) {
    %c0_i32 = arith.constant 0 : i32
    %c0_i32_0 = arith.constant 0 : i32
    return %arg0, %c0_i32 : i32, i32
  }
}

</mosaic_0001>

<llo_original>
// kernel: tpu_custom_call.1
$region0: #{tpu_custom_call.1}
  #allocation0 [shape = 'u32[]', space=smem, size = 0x4, offset = 0x4, fixed_abs, tag = 'smem constant byte address 0x4 - core index']
  #allocation1 [shape = 'u32[144,128]{1,0:T(1,128)}', space=vmem, size = 0x12000, scoped, tag = 'internal scratch']
  %s0 = inlined_call_operand.hbm [shape: f32[8,256], index: 0, kind: input, shape index: {}]
  %s1 = inlined_call_operand.hbm [shape: f32[8,256], index: 1, kind: output, shape index: {}]
  %s2 = sld [smem:[#allocation0]]
  $region18: #{tpu_custom_call.1} parent=0
    _
  %s4 = ssub.s32 1, %s2
  %s5 = scalar_select 0, %s4, %s2
  $region1: #{tpu_custom_call.1} parent=0
    #allocation2 [shape = 'u8[8192]{0}', space=vmem, size = 0x2000, scoped, tag = 'input window, operand 0, single buffered']
    #allocation3 [shape = 's32[1]{0}', space=sflag, size = 0x4, scoped, tag = 'scoped memory for tpu_custom_call.1']
    #allocation4 [shape = 's32[1]{0}', space=sflag, size = 0x4, scoped, tag = 'scoped memory for tpu_custom_call.1']
    #allocation5 [shape = 'u8[8192]{0}', space=vmem, size = 0x2000, scoped, tag = 'output window, operand 0, single buffered']
    %6 = vsyncpa [#allocation3], 0
    %7 = vsyncpa [#allocation4], 0
    // Predicated region
    $region2: #{tpu_custom_call.1} parent=1 // pred_check
      _
    $region3: #{tpu_custom_call.1} parent=1 // pred_check_branch
      %9 = sbr.rel (0) target = $region5
    $region4: #{tpu_custom_call.1} parent=1 // pred_region
      %s11 = ssub.s32 256, 256
      %12 = vsyncadd [#allocation3], %s11
      %s14 = sshll.u32 [#allocation2], 4
      %s15 = int_to_ptr.vmem [resolvable:$true] %s14
      %17 = dma.hbm_to_vmem [thread:$0]  %s0, 256, %s15, [#allocation3]
    $region5: #{tpu_custom_call.1} parent=1 // pred_fallthru
      _
    // Predicated region
    $region6: #{tpu_custom_call.1} parent=1 // pred_check
      _
    $region7: #{tpu_custom_call.1} parent=1 // pred_check_branch
      %19 = sbr.rel (0) target = $region9
    $region8: #{tpu_custom_call.1} parent=1 // pred_region
      %20 = dma.done [#allocation3], 256
    $region9: #{tpu_custom_call.1} parent=1 // pred_fallthru
      _
    %v21 = vld [vmem:[#allocation2] sm:$0xff]
    %v22 = vld [vmem:[#allocation2 + $0x8] sm:$0xff]
    %v23 = vsub.f32 0.0, %v21
    %v24 = vsub.f32 0.0, %v22
    %v25 = vmul.f32 %v23, 1.442695
    %v26 = vpow.pop %v25
    %v27 = vmul.f32 %v24, 1.442695
    %v28 = vpow.pop %v27
    %v29 = vadd.f32 %v26, 1.0
    %v30 = vadd.f32 %v28, 1.0
    %v31 = vrcp.pop %v29
    %v32 = vrcp.pop %v30
    %v33 = vmul.f32 %v21, %v31
    %v34 = vmul.f32 %v22, %v32
    %35 = vst [vmem:[#allocation5] sm:$0xff] %v33
    %36 = vst [vmem:[#allocation5 + $0x8] sm:$0xff] %v34
    // Predicated region
    $region10: #{tpu_custom_call.1} parent=1 // pred_check
      _
    $region11: #{tpu_custom_call.1} parent=1 // pred_check_branch
      %38 = sbr.rel (0) target = $region13
    $region12: #{tpu_custom_call.1} parent=1 // pred_region
      %s40 = ssub.s32 256, 256
      %41 = vsyncadd [#allocation4], %s40
      %s43 = sshll.u32 [#allocation5], 4
      %s44 = int_to_ptr.vmem [resolvable:$true] %s43
      %46 = dma.vmem_to_hbm [thread:$0]  %s44, 256, %s1, [#allocation4]
    $region13: #{tpu_custom_call.1} parent=1 // pred_fallthru
      _
    // Predicated region
    $region14: #{tpu_custom_call.1} parent=1 // pred_check
      _
    $region15: #{tpu_custom_call.1} parent=1 // pred_check_branch
      %48 = sbr.rel (0) target = $region17
    $region16: #{tpu_custom_call.1} parent=1 // pred_region
      %49 = dma.done [#allocation4], 256
    $region17: #{tpu_custom_call.1} parent=1 // pred_fallthru
      _
    %50 = vsyncpa [#allocation3], 1
    %51 = vsyncpa [#allocation4], 1

</llo_original>
